<compile_context>
chip_gen: v7x
topology: tpu7x:2x2x1
jax: 0.10.0
libtpu: 0.0.40
codegen_flags: <defaults>
</compile_context>

<pallas_src>
import jax
import jax.numpy as jnp
import numpy as np
from jax.experimental import pallas as pl
from jax.experimental.pallas import tpu as pltpu


def _round_up(x, m):
    return (x + m - 1) // m * m


# ----------------------------- Pallas kernel --------------------------------

def _outconv_kernel(x_ref, w_ref, b_ref, o_ref):
    # x_ref: (C_in, TS)   w_ref: (C_out, C_in)   b_ref: (C_out, 1)
    # o_ref: (C_out, TS)
    acc = jnp.dot(w_ref[...], x_ref[...], preferred_element_type=jnp.float32)
    o_ref[...] = (acc + b_ref[...]).astype(o_ref.dtype)


# ------------------------------ OutConv forward ------------------------------

def outconv_forward(x, w, b):
    """OutConv.forward: Conv3d(in, out, kernel_size=1) on NCDHW input.
    x: (N, C_in, D, H, W); w: PyTorch layout (C_out, C_in, 1, 1, 1); b: (C_out,)."""
    Nb, C_in, D, H, W = x.shape
    C_out = w.shape[0]
    S = D * H * W

    w2d = w.reshape(C_out, C_in).astype(x.dtype)      # (C_out, C_in)
    b2d = b.reshape(C_out, 1).astype(jnp.float32)     # (C_out, 1)
    x3 = x.reshape(Nb, C_in, S)                       # free reshape, stays NCDHW

    # ---- spatial (lane) tile size -------------------------------------------
    # Double-buffered x + out tiles kept within a conservative VMEM budget so
    # the kernel fits the default scoped VMEM on all generations (16 MiB v5e).
    VMEM_BUDGET = 12 * 1024 * 1024
    bytes_per_col = 2 * (C_in + C_out) * 4            # double-buffered, f32
    ts_cap = max(128, (VMEM_BUDGET // bytes_per_col) // 128 * 128)
    TS_MAX = 32768                                    # amortize ~0.35us/step
    S_128 = _round_up(S, 128)
    TS = min(TS_MAX, ts_cap, S_128)
    # Guarantee >=2 total grid steps so v7x's two TensorCores both get work.
    if Nb == 1 and S_128 <= TS and S_128 > 128:
        TS = _round_up(pl.cdiv(S_128, 2), 128)

    S_pad = _round_up(S, TS)                          # at most one extra tile
    if S_pad != S:
        x3 = jnp.pad(x3, ((0, 0), (0, 0), (0, S_pad - S)))

    grid = (Nb, S_pad // TS)

    cost = pl.CostEstimate(
        flops=2 * Nb * S * C_in * C_out,
        bytes_accessed=4 * (Nb * S * (C_in + C_out) + C_in * C_out + C_out),
        transcendentals=0,
    )

    out = pl.pallas_call(
        _outconv_kernel,
        out_shape=jax.ShapeDtypeStruct((Nb, C_out, S_pad), x.dtype),
        grid=grid,
        in_specs=[
            # batch dim squeezed; C_in = full dim (satisfies (8,128) rule),
            # TS is a multiple of 128 -> lane-dense loads.
            pl.BlockSpec((None, C_in, TS), lambda n, s: (n, 0, s)),
            pl.BlockSpec((C_out, C_in), lambda n, s: (0, 0)),   # whole weight
            pl.BlockSpec((C_out, 1), lambda n, s: (0, 0)),      # whole bias
        ],
        out_specs=pl.BlockSpec((None, C_out, TS), lambda n, s: (n, 0, s)),
        compiler_params=pltpu.CompilerParams(
            dimension_semantics=("parallel", "parallel")),
        cost_estimate=cost,
    )(x3, w2d, b2d)

    if S_pad != S:
        out = out[:, :, :S]
    return out.reshape(Nb, C_out, D, H, W)            # free reshape, NCDHW


# ------------------------------ Pure-JAX reference ---------------------------

def outconv_reference(x, w, b):
    C_out, C_in = w.shape[:2]
    y = jnp.einsum('ncdhw,oc->nodhw', x, w.reshape(C_out, C_in))
    return y + b.reshape(1, C_out, 1, 1, 1)


# ----------------------------------- main ------------------------------------

if __name__ == "__main__":
    key = jax.random.PRNGKey(0)
    k1, k2, k3 = jax.random.split(key, 3)

    Nb, C_in, C_out = 2, 8, 4
    D = H = W = 8

    x = jax.random.normal(k1, (Nb, C_in, D, H, W), jnp.float32)
    # PyTorch Conv3d weight/bias layout: (C_out, C_in, 1, 1, 1), (C_out,)
    w = 0.1 * jax.random.normal(k2, (C_out, C_in, 1, 1, 1), jnp.float32)
    b = 0.1 * jax.random.normal(k3, (C_out,), jnp.float32)

    out = jax.block_until_ready(jax.jit(outconv_forward)(x, w, b))
    ref = jax.block_until_ready(outconv_reference(x, w, b))

    assert out.shape == (Nb, C_out, D, H, W), out.shape
    np.testing.assert_allclose(np.asarray(out), np.asarray(ref),
                               atol=5e-3, rtol=5e-3)
    print("KERNEL_OK")
</pallas_src>

<mosaic_0001>
module attributes {stable_mosaic.version = 11 : i64} {
  func.func @_outconv_kernel(%arg0: i32, %arg1: i32, %arg2: memref<1x8x512xf32, #tpu.memory_space<vmem>>, %arg3: memref<4x8xf32, #tpu.memory_space<vmem>>, %arg4: memref<4x1xf32, #tpu.memory_space<vmem>>, %arg5: memref<1x4x512xf32, #tpu.memory_space<vmem>>) attributes {dimension_semantics = [#tpu.dimension_semantics<parallel>, #tpu.dimension_semantics<parallel>], iteration_bounds = array<i64: 2, 1>, scalar_prefetch = 0 : i64, scratch_operands = 0 : i64, tpu.core_type = #tpu.core_type<tc>, window_params = [{transform_indices = @transform_0, window_bounds = array<i64: 1, 8, 512>}, {pipeline_mode = #tpu.pipeline_mode<synchronous>, transform_indices = @transform_1, window_bounds = array<i64: 4, 8>}, {pipeline_mode = #tpu.pipeline_mode<synchronous>, transform_indices = @transform_2, window_bounds = array<i64: 4, 1>}, {transform_indices = @transform_3, window_bounds = array<i64: 1, 4, 512>}]} {
    %c0 = arith.constant 0 : index
    %c0_0 = arith.constant 0 : index
    %0 = vector.load %arg3[%c0, %c0_0] : memref<4x8xf32, #tpu.memory_space<vmem>>, vector<4x8xf32>
    %c0_1 = arith.constant 0 : index
    %c0_2 = arith.constant 0 : index
    %c0_3 = arith.constant 0 : index
    %1 = vector.load %arg2[%c0_1, %c0_2, %c0_3] : memref<1x8x512xf32, #tpu.memory_space<vmem>>, vector<1x8x512xf32>
    %2 = vector.shape_cast %1 : vector<1x8x512xf32> to vector<8x512xf32>
    %cst = arith.constant dense<0.000000e+00> : vector<4x512xf32>
    %3 = tpu.matmul %0, %2, %cst {dimension_numbers = #tpu.dot_dimension_numbers<[1], [0], [0], [1], [0, 0, 1, 1], [], []>} : vector<4x8xf32>, vector<8x512xf32>, vector<4x512xf32> -> vector<4x512xf32>
    %c0_4 = arith.constant 0 : index
    %c0_5 = arith.constant 0 : index
    %4 = vector.load %arg4[%c0_4, %c0_5] : memref<4x1xf32, #tpu.memory_space<vmem>>, vector<4x1xf32>
    %5 = vector.broadcast %4 : vector<4x1xf32> to vector<4x512xf32>
    %6 = arith.addf %3, %5 : vector<4x512xf32>
    %c0_6 = arith.constant 0 : index
    %c0_7 = arith.constant 0 : index
    %c0_8 = arith.constant 0 : index
    %7 = vector.load %arg5[%c0_6, %c0_7, %c0_8] : memref<1x4x512xf32, #tpu.memory_space<vmem>>, vector<1x4x512xf32>
    %8 = vector.shape_cast %7 : vector<1x4x512xf32> to vector<4x512xf32>
    %9 = vector.shape_cast %6 : vector<4x512xf32> to vector<1x4x512xf32>
    tpu.vector_store %arg5[%c0_6, %c0_7, %c0_8], %9 {strides = array<i32>} : memref<1x4x512xf32, #tpu.memory_space<vmem>>, vector<1x4x512xf32>,
    return
  }
  func.func @transform_0(%arg0: i32, %arg1: i32) -> (i32, i32, i32) {
    %c0_i32 = arith.constant 0 : i32
    %c0_i32_0 = arith.constant 0 : i32
    return %arg0, %c0_i32, %arg1 : i32, i32, i32
  }
  func.func @transform_1(%arg0: i32, %arg1: i32) -> (i32, i32) {
    %c0_i32 = arith.constant 0 : i32
    %c0_i32_0 = arith.constant 0 : i32
    %c0_i32_1 = arith.constant 0 : i32
    return %c0_i32, %c0_i32_0 : i32, i32
  }
  func.func @transform_2(%arg0: i32, %arg1: i32) -> (i32, i32) {
    %c0_i32 = arith.constant 0 : i32
    %c0_i32_0 = arith.constant 0 : i32
    %c0_i32_1 = arith.constant 0 : i32
    return %c0_i32, %c0_i32_0 : i32, i32
  }
  func.func @transform_3(%arg0: i32, %arg1: i32) -> (i32, i32, i32) {
    %c0_i32 = arith.constant 0 : i32
    %c0_i32_0 = arith.constant 0 : i32
    return %arg0, %c0_i32, %arg1 : i32, i32, i32
  }
}

</mosaic_0001>

<llo_original>
// kernel: outconv_forward.1
$region0: #{outconv_forward.1}
  #allocation0 [shape = 'u32[]', space=smem, size = 0x4, offset = 0x4, fixed_abs, tag = 'smem constant byte address 0x4 - core index']
  #allocation1 [shape = 'u32[144,128]{1,0:T(1,128)}', space=vmem, size = 0x12000, scoped, tag = 'internal scratch']
  %s0 = inlined_call_operand.vmem [shape: f32[2,8,512], index: 0, kind: input, shape index: {}]
  %s1 = inlined_call_operand.vmem [shape: f32[4,8], index: 1, kind: input, shape index: {}]
  %s2 = inlined_call_operand.vmem [shape: f32[4,1], index: 2, kind: input, shape index: {}]
  %s3 = inlined_call_operand.vmem [shape: f32[2,4,512], index: 3, kind: output, shape index: {}]
  %s4 = sld [smem:[#allocation0]]
  $region45: #{outconv_forward.1} parent=0
    _
  %s6 = ssub.s32 1, %s4
  %s7 = scalar_select 0, %s6, %s4
  loop: start=0, step=1, limit=4
  $region2: #{outconv_forward.1} parent=0 // loop_pre_header
    _
  $region3: #{outconv_forward.1} parent=0 // loop_header
    %s9 = sphi 0, %s13
    %p10 = scmp.ge.s32.totalorder %s9, 4
    %s16 = sphi 0, %s28
    %s17 = sphi 0, %s24
    %s18 = sphi 0, %s16
    %s19 = sphi 0, %s17
    %s20 = sphi 0, %s18
    %s21 = sphi 0, %s19
    %s33 = sphi 0, %s35
    %s36 = sphi 0, %s33
    %s37 = sphi 0, %s36
    %s53 = sphi 0, %s37
    %s57 = sphi 0, %s57
    %s59 = sphi 0, %s57
    %s60 = sphi 0, %s59
    %s74 = sphi 0, %s60
    %s78 = sphi 0, %s78
    %s80 = sphi 0, %s78
    %s81 = sphi 0, %s80
    %s95 = sphi 0, %s81
    %s103 = sphi 0, %s105
    %s106 = sphi 0, %s103
    %s107 = sphi 0, %s106
    %s123 = sphi 0, %s107
  $region4: #{outconv_forward.1} parent=0 // loop_header_branch
    %12 = sbr.rel (%p10) target = $region8
  $region5: #{outconv_forward.1} parent=0 // loop_body
    %s14 = ssub.s32 %s9, 1
    %s15 = ssub.s32 %s9, 2
    %s22 = sadd.s32 1, %s17
    %p23 = scmp.ge.s32.totalorder %s22, 1
    %s24 = scalar_select %p23, 0, %s22
    %s25 = sadd.s32 1, %s16
    %s26 = scalar_select %p23, %s25, %s16
    %p27 = scmp.ge.s32.totalorder %s26, 2
    %s28 = scalar_select %p27, 0, %s26
    %s29 = ssub.s32 %s16, %s28
    %s30 = ssub.s32 %s17, %s24
    %s31 = sor.u32 %s29, %s30
    %p32 = scmp.eq.s32.totalorder %s31, 0
    %s34 = sadd.s32 %s33, 1
    %s35 = scalar_select %p32, %s33, %s34
    %p38 = pneg %p32
    %p39 = scmp.eq.s32.totalorder %s9, 1
    %p40 = por %p38, %p39
    %p41 = scmp.ne.s32.totalorder %s33, %s36
    %p42 = scmp.eq.s32.totalorder %s9, 0
    %p43 = por %p41, %p42
    %p44 = scmp.ne.s32.totalorder %s33, %s36
    %p45 = scmp.eq.s32.totalorder %s14, 1
    %p46 = por %p44, %p45
    %p47 = scmp.ne.s32.totalorder %s36, %s37
    %p48 = scmp.eq.s32.totalorder %s14, 0
    %p49 = por %p47, %p48
    %p50 = scmp.ne.s32.totalorder %s36, %s37
    %p51 = scmp.eq.s32.totalorder %s15, 1
    %p52 = por %p50, %p51
    %p54 = scmp.ne.s32.totalorder %s37, %s53
    %p55 = scmp.eq.s32.totalorder %s15, 0
    %p56 = por %p54, %p55
    %s58 = sadd.s32 %s57, 1
    %p61 = scmp.eq.s32.totalorder %s9, 1
    %p62 = scmp.ne.s32.totalorder %s57, %s59
    %p63 = scmp.eq.s32.totalorder %s9, 0
    %p64 = por %p62, %p63
    %p65 = scmp.ne.s32.totalorder %s57, %s59
    %p66 = scmp.eq.s32.totalorder %s14, 1
    %p67 = por %p65, %p66
    %p68 = scmp.ne.s32.totalorder %s59, %s60
    %p69 = scmp.eq.s32.totalorder %s14, 0
    %p70 = por %p68, %p69
    %p71 = scmp.ne.s32.totalorder %s59, %s60
    %p72 = scmp.eq.s32.totalorder %s15, 1
    %p73 = por %p71, %p72
    %p75 = scmp.ne.s32.totalorder %s60, %s74
    %p76 = scmp.eq.s32.totalorder %s15, 0
    %p77 = por %p75, %p76
    %s79 = sadd.s32 %s78, 1
    %p82 = scmp.eq.s32.totalorder %s9, 1
    %p83 = scmp.ne.s32.totalorder %s78, %s80
    %p84 = scmp.eq.s32.totalorder %s9, 0
    %p85 = por %p83, %p84
    %p86 = scmp.ne.s32.totalorder %s78, %s80
    %p87 = scmp.eq.s32.totalorder %s14, 1
    %p88 = por %p86, %p87
    %p89 = scmp.ne.s32.totalorder %s80, %s81
    %p90 = scmp.eq.s32.totalorder %s14, 0
    %p91 = por %p89, %p90
    %p92 = scmp.ne.s32.totalorder %s80, %s81
    %p93 = scmp.eq.s32.totalorder %s15, 1
    %p94 = por %p92, %p93
    %p96 = scmp.ne.s32.totalorder %s81, %s95
    %p97 = scmp.eq.s32.totalorder %s15, 0
    %p98 = por %p96, %p97
    %s99 = ssub.s32 %s16, %s28
    %s100 = ssub.s32 %s17, %s24
    %s101 = sor.u32 %s99, %s100
    %p102 = scmp.eq.s32.totalorder %s101, 0
    %s104 = sadd.s32 %s103, 1
    %s105 = scalar_select %p102, %s103, %s104
    %p108 = pneg %p102
    %p109 = scmp.eq.s32.totalorder %s9, 1
    %p110 = por %p108, %p109
    %p111 = scmp.ne.s32.totalorder %s103, %s106
    %p112 = scmp.eq.s32.totalorder %s9, 0
    %p113 = por %p111, %p112
    %p114 = scmp.ne.s32.totalorder %s103, %s106
    %p115 = scmp.eq.s32.totalorder %s14, 1
    %p116 = por %p114, %p115
    %p117 = scmp.ne.s32.totalorder %s106, %s107
    %p118 = scmp.eq.s32.totalorder %s14, 0
    %p119 = por %p117, %p118
    %p120 = scmp.ne.s32.totalorder %s106, %s107
    %p121 = scmp.eq.s32.totalorder %s15, 1
    %p122 = por %p120, %p121
    %p124 = scmp.ne.s32.totalorder %s107, %s123
    %p125 = scmp.eq.s32.totalorder %s15, 0
    %p126 = por %p124, %p125
    %p127 = scmp.le.s32.totalorder 1, %s9
    %p128 = scmp.lt.s32.totalorder %s9, 3
    %p129 = pnand %p127, %p128
    %p130 = pneg %p129
    // Predicated region
    $region9: #{outconv_forward.1} parent=5 // pred_check
      _
    $region10: #{outconv_forward.1} parent=5 // pred_check_branch
      %132 = sbr.rel (%p129) target = $region12
    $region11: #{outconv_forward.1} parent=5 // pred_region
      %s133 = ssub.s32 %s9, 1
      // Predicated region
      $region13: #{outconv_forward.1} parent=11 // pred_check
        %p134 = pneg %p70
      $region14: #{outconv_forward.1} parent=11 // pred_check_branch
        %136 = sbr.rel (%p134) target = $region16
      $region15: #{outconv_forward.1} parent=11 // pred_region
        _
      $region16: #{outconv_forward.1} parent=11 // pred_fallthru
        _
      // Predicated region
      $region17: #{outconv_forward.1} parent=11 // pred_check
        %p137 = pneg %p91
      $region18: #{outconv_forward.1} parent=11 // pred_check_branch
        %139 = sbr.rel (%p137) target = $region20
      $region19: #{outconv_forward.1} parent=11 // pred_region
        _
      $region20: #{outconv_forward.1} parent=11 // pred_fallthru
        _
    $region12: #{outconv_forward.1} parent=5 // pred_fallthru
      _
    %p140 = scmp.lt.s32.totalorder %s9, 2
    // Predicated region
    $region21: #{outconv_forward.1} parent=5 // pred_check
      %p141 = pneg %p140
    $region22: #{outconv_forward.1} parent=5 // pred_check_branch
      %143 = sbr.rel (%p141) target = $region24
    $region23: #{outconv_forward.1} parent=5 // pred_region
      // Predicated region
      $region25: #{outconv_forward.1} parent=23 // pred_check
        %p144 = pneg %p43
      $region26: #{outconv_forward.1} parent=23 // pred_check_branch
        %146 = sbr.rel (%p144) target = $region28
      $region27: #{outconv_forward.1} parent=23 // pred_region
        %s147 = smul.u32 4, %s17
        %p148 = scmp.lt.s32.totalorder %s16, 1
        %s149 = scalar_select %p148, %s16, 1
        %p150 = scmp.lt.s32.totalorder %s147, 3
        %s151 = scalar_select %p150, %s147, 3
        %s152 = smul.addr %s149, 4
        %s153 = sadd.s32 %s151, %s152
        %s154 = smul.addr %s153, 8
        %s155 = scalar_lea.vmem %s0, %s154
        %s156 = smul.u32 4, %s17
      $region28: #{outconv_forward.1} parent=23 // pred_fallthru
        _
    $region24: #{outconv_forward.1} parent=5 // pred_fallthru
      _
    %p157 = scmp.le.s32.totalorder 1, %s9
    %p158 = scmp.lt.s32.totalorder %s9, 3
    %p159 = pnand %p157, %p158
    %p160 = pneg %p159
    // Predicated region
    $region29: #{outconv_forward.1} parent=5 // pred_check
      _
    $region30: #{outconv_forward.1} parent=5 // pred_check_branch
      %162 = sbr.rel (%p159) target = $region32
    $region31: #{outconv_forward.1} parent=5 // pred_region
      %s163 = ssub.s32 %s9, 1
      %s164 = smul.u32 4, %s19
      %p165 = scmp.lt.s32.totalorder %s18, 1
      %s166 = scalar_select %p165, %s18, 1
      %p167 = scmp.lt.s32.totalorder %s164, 3
      %s168 = scalar_select %p167, %s164, 3
      %s169 = smul.addr %s166, 4
      %s170 = sadd.s32 %s168, %s169
      %s171 = smul.addr %s170, 8
      %s172 = scalar_lea.vmem %s0, %s171
      %p173 = pneg %p49
      %p174 = pneg %p46
      %p175 = pneg %p70
      %p176 = pneg %p67
      %p177 = pneg %p91
      %p178 = pneg %p88
      %p179 = pneg %p119
      %p180 = pneg %p116
      %s181 = smul.u32 4, %s19
      %p182 = scmp.lt.s32.totalorder %s18, 1
      %s183 = scalar_select %p182, %s18, 1
      %p184 = scmp.lt.s32.totalorder %s181, 3
      %s185 = scalar_select %p184, %s181, 3
      %s186 = smul.addr %s183, 4
      %s187 = sadd.s32 %s185, %s186
      %s188 = smul.addr %s187, 4
      %s189 = scalar_lea.vmem %s3, %s188
      %s190 = smul.u32 4, %s19
      %p191 = scmp.lt.s32.totalorder %s18, 1
      %s192 = scalar_select %p191, %s18, 1
      %p193 = scmp.lt.s32.totalorder %s190, 3
      %s194 = scalar_select %p193, %s190, 3
      %s195 = smul.addr %s192, 4
      %s196 = sadd.s32 %s194, %s195
      %s197 = smul.addr %s196, 8
      %s198 = scalar_lea.vmem %s0, %s197
      %s199 = smul.u32 4, %s19
      %s200 = smul.u32 4, %s19
      %p201 = scmp.lt.s32.totalorder %s18, 1
      %s202 = scalar_select %p201, %s18, 1
      %p203 = scmp.lt.s32.totalorder %s200, 3
      %s204 = scalar_select %p203, %s200, 3
      %s205 = smul.addr %s202, 4
      %s206 = sadd.s32 %s204, %s205
      %s207 = smul.addr %s206, 4
      %s208 = scalar_lea.vmem %s3, %s207
      %s209 = smul.u32 4, %s19
      %v210 = vld [vmem:[%s1] sm:$0xf]
      %v211 = vld [vmem:[%s198] sm:$0xff]
      %v212 = vld [vmem:[%s198 + $0x8] sm:$0xff]
      %v213 = vld [vmem:[%s198 + $0x10] sm:$0xff]
      %v214 = vld [vmem:[%s198 + $0x18] sm:$0xff]
      %v215 = vld [vmem:[%s2] sm:$0xf]
      %217 = vset.pattern.permute.xlu0 0
      %218 = vperm.xlu0 %217, %v215
      %v219 = vpop.permute.xlu0 %218
      %vm221 = vcmask 64512
      %v223 = vsel %vm221, %v210, 0
      %225 = vmatprep.subr.mxu0 %v212
      %226 = vmatpush1.msra.mxu0 %v211
      %227 = vmatprep.subr.mxu0 0.0
      %228 = vmatpush1.msra.mxu0 0.0
      %229 = vmatprep.subr.mxu0 0.0
      %230 = vmatpush1.msra.mxu0 0.0
      %231 = vmatprep.subr.mxu0 0.0
      %232 = vmatpush1.msra.mxu0 0.0
      %233 = vmatprep.subr.mxu0 0.0
      %234 = vmatpush1.msra.mxu0 0.0
      %235 = vmatprep.subr.mxu0 0.0
      %236 = vmatpush1.msra.mxu0 0.0
      %237 = vmatprep.subr.mxu0 0.0
      %238 = vmatpush1.msra.mxu0 0.0
      %239 = vmatprep.subr.mxu0 0.0
      %240 = vmatpush1.msra.mxu0 0.0
      %241 = vmatprep.subr.mxu0 0.0
      %242 = vmatpush1.msra.mxu0 0.0
      %243 = vmatprep.subr.mxu0 0.0
      %244 = vmatpush1.msra.mxu0 0.0
      %245 = vmatprep.subr.mxu0 0.0
      %246 = vmatpush1.msra.mxu0 0.0
      %247 = vmatprep.subr.mxu0 0.0
      %248 = vmatpush1.msra.mxu0 0.0
      %249 = vmatprep.subr.mxu0 0.0
      %250 = vmatpush1.msra.mxu0 0.0
      %251 = vmatprep.subr.mxu0 0.0
      %252 = vmatpush1.msra.mxu0 0.0
      %253 = vmatprep.subr.mxu0 0.0
      %254 = vmatpush1.msra.mxu0 0.0
      %255 = vmatprep.subr.mxu0 0.0
      %256 = vmatpush1.msra.mxu0 0.0
      %257 = vmatprep.subr.mxu0 0.0
      %258 = vmatpush1.msra.mxu0 0.0
      %259 = vmatprep.subr.mxu0 0.0
      %260 = vmatpush1.msra.mxu0 0.0
      %261 = vmatprep.subr.mxu0 0.0
      %262 = vmatpush1.msra.mxu0 0.0
      %263 = vmatprep.subr.mxu0 0.0
      %264 = vmatpush1.msra.mxu0 0.0
      %265 = vmatprep.subr.mxu0 0.0
      %266 = vmatpush1.msra.mxu0 0.0
      %267 = vmatprep.subr.mxu0 0.0
      %268 = vmatpush1.msra.mxu0 0.0
      %269 = vmatprep.subr.mxu0 0.0
      %270 = vmatpush1.msra.mxu0 0.0
      %271 = vmatprep.subr.mxu0 0.0
      %272 = vmatpush1.msra.mxu0 0.0
      %273 = vmatprep.subr.mxu0 0.0
      %274 = vmatpush1.msra.mxu0 0.0
      %275 = vmatprep.subr.mxu0 0.0
      %276 = vmatpush1.msra.mxu0 0.0
      %277 = vmatprep.subr.mxu0 0.0
      %278 = vmatpush1.msra.mxu0 0.0
      %279 = vmatprep.subr.mxu0 0.0
      %280 = vmatpush1.msra.mxu0 0.0
      %281 = vmatprep.subr.mxu0 0.0
      %282 = vmatpush1.msra.mxu0 0.0
      %283 = vmatprep.subr.mxu0 0.0
      %284 = vmatpush1.msra.mxu0 0.0
      %285 = vmatprep.subr.mxu0 0.0
      %286 = vmatpush1.msra.mxu0 0.0
      %287 = vmatprep.subr.mxu0 0.0
      %288 = vmatpush1.msra.mxu0 0.0
      %289 = vmatprep.mubr.f32.mxu0 0.0
      %290 = vmatmul.mubr.f32.gmra.mrb[0].mxu0 %v223
      %v291 = vpop.f32.mrb[0].mxu0
      %v292 = vadd.f32 %v219, %v291
      %v293 = vpop.f32.mrb[0].mxu0
      %v294 = vadd.f32 %v219, %v293
      %295 = vdwg.mxu0
      %296 = vmatprep.subr.mxu0 %v214
      %297 = vmatpush1.msra.mxu0 %v213
      %298 = vmatprep.subr.mxu0 0.0
      %299 = vmatpush1.msra.mxu0 0.0
      %300 = vmatprep.subr.mxu0 0.0
      %301 = vmatpush1.msra.mxu0 0.0
      %302 = vmatprep.subr.mxu0 0.0
      %303 = vmatpush1.msra.mxu0 0.0
      %304 = vmatprep.subr.mxu0 0.0
      %305 = vmatpush1.msra.mxu0 0.0
      %306 = vmatprep.subr.mxu0 0.0
      %307 = vmatpush1.msra.mxu0 0.0
      %308 = vmatprep.subr.mxu0 0.0
      %309 = vmatpush1.msra.mxu0 0.0
      %310 = vmatprep.subr.mxu0 0.0
      %311 = vmatpush1.msra.mxu0 0.0
      %312 = vmatprep.subr.mxu0 0.0
      %313 = vmatpush1.msra.mxu0 0.0
      %314 = vmatprep.subr.mxu0 0.0
      %315 = vmatpush1.msra.mxu0 0.0
      %316 = vmatprep.subr.mxu0 0.0
      %317 = vmatpush1.msra.mxu0 0.0
      %318 = vmatprep.subr.mxu0 0.0
      %319 = vmatpush1.msra.mxu0 0.0
      %320 = vmatprep.subr.mxu0 0.0
      %321 = vmatpush1.msra.mxu0 0.0
      %322 = vmatprep.subr.mxu0 0.0
      %323 = vmatpush1.msra.mxu0 0.0
      %324 = vmatprep.subr.mxu0 0.0
      %325 = vmatpush1.msra.mxu0 0.0
      %326 = vmatprep.subr.mxu0 0.0
      %327 = vmatpush1.msra.mxu0 0.0
      %328 = vmatprep.subr.mxu0 0.0
      %329 = vmatpush1.msra.mxu0 0.0
      %330 = vmatprep.subr.mxu0 0.0
      %331 = vmatpush1.msra.mxu0 0.0
      %332 = vmatprep.subr.mxu0 0.0
      %333 = vmatpush1.msra.mxu0 0.0
      %334 = vmatprep.subr.mxu0 0.0
      %335 = vmatpush1.msra.mxu0 0.0
      %336 = vmatprep.subr.mxu0 0.0
      %337 = vmatpush1.msra.mxu0 0.0
      %338 = vmatprep.subr.mxu0 0.0
      %339 = vmatpush1.msra.mxu0 0.0
      %340 = vmatprep.subr.mxu0 0.0
      %341 = vmatpush1.msra.mxu0 0.0
      %342 = vmatprep.subr.mxu0 0.0
      %343 = vmatpush1.msra.mxu0 0.0
      %344 = vmatprep.subr.mxu0 0.0
      %345 = vmatpush1.msra.mxu0 0.0
      %346 = vmatprep.subr.mxu0 0.0
      %347 = vmatpush1.msra.mxu0 0.0
      %348 = vmatprep.subr.mxu0 0.0
      %349 = vmatpush1.msra.mxu0 0.0
      %350 = vmatprep.subr.mxu0 0.0
      %351 = vmatpush1.msra.mxu0 0.0
      %352 = vmatprep.subr.mxu0 0.0
      %353 = vmatpush1.msra.mxu0 0.0
      %354 = vmatprep.subr.mxu0 0.0
      %355 = vmatpush1.msra.mxu0 0.0
      %356 = vmatprep.subr.mxu0 0.0
      %357 = vmatpush1.msra.mxu0 0.0
      %358 = vmatprep.subr.mxu0 0.0
      %359 = vmatpush1.msra.mxu0 0.0
      %360 = vmatprep.mubr.f32.mxu0 0.0
      %361 = vmatmul.mubr.f32.gmra.mrb[0].mxu0 %v223
      %v362 = vpop.f32.mrb[0].mxu0
      %v363 = vadd.f32 %v219, %v362
      %v364 = vpop.f32.mrb[0].mxu0
      %v365 = vadd.f32 %v219, %v364
      %366 = vdwg.mxu0
      %v371 = vcombine.low %v292, %v294
      %v372 = vcombine.low %v363, %v365
      %375 = vst [vmem:[%s208] sm:$0xff] %v371
      %376 = vst [vmem:[%s208 + $0x8] sm:$0xff] %v372
      %s377 = smul.u32 4, %s19
      %p378 = scmp.lt.s32.totalorder %s18, 1
      %s379 = scalar_select %p378, %s18, 1
      %p380 = scmp.lt.s32.totalorder %s377, 3
      %s381 = scalar_select %p380, %s377, 3
      %s382 = smul.addr %s379, 4
      %s383 = sadd.s32 %s381, %s382
      %s384 = smul.addr %s383, 4
      %s385 = scalar_lea.vmem %s3, %s384
      // Predicated region
      $region33: #{outconv_forward.1} parent=31 // pred_check
        %p386 = pneg %p116
      $region34: #{outconv_forward.1} parent=31 // pred_check_branch
        %388 = sbr.rel (%p386) target = $region36
      $region35: #{outconv_forward.1} parent=31 // pred_region
        %s389 = smul.u32 4, %s19
      $region36: #{outconv_forward.1} parent=31 // pred_fallthru
        _
    $region32: #{outconv_forward.1} parent=5 // pred_fallthru
      _
    %p390 = scmp.le.s32.totalorder 2, %s9
    // Predicated region
    $region37: #{outconv_forward.1} parent=5 // pred_check
      %p391 = pneg %p390
    $region38: #{outconv_forward.1} parent=5 // pred_check_branch
      %393 = sbr.rel (%p391) target = $region40
    $region39: #{outconv_forward.1} parent=5 // pred_region
      %s394 = ssub.s32 %s9, 2
      // Predicated region
      $region41: #{outconv_forward.1} parent=39 // pred_check
        %p395 = pneg %p122
      $region42: #{outconv_forward.1} parent=39 // pred_check_branch
        %397 = sbr.rel (%p395) target = $region44
      $region43: #{outconv_forward.1} parent=39 // pred_region
        %s398 = smul.u32 4, %s21
        %p399 = scmp.lt.s32.totalorder %s20, 1
        %s400 = scalar_select %p399, %s20, 1
        %p401 = scmp.lt.s32.totalorder %s398, 3
        %s402 = scalar_select %p401, %s398, 3
        %s403 = smul.addr %s400, 4
        %s404 = sadd.s32 %s402, %s403
        %s405 = smul.addr %s404, 4
        %s406 = scalar_lea.vmem %s3, %s405
      $region44: #{outconv_forward.1} parent=39 // pred_fallthru
        _
    $region40: #{outconv_forward.1} parent=5 // pred_fallthru
      _
  $region6: #{outconv_forward.1} parent=0 // loop_footer
    %s13 = sadd.s32 1, %s9
  $region7: #{outconv_forward.1} parent=0 // loop_footer_branch
    %8 = sbr.rel target = $region3
  $region8: #{outconv_forward.1} parent=0 // loop_exit
    _

</llo_original>
